<compile_context>
chip_gen: v6e
topology: v6e:2x2x1
jax: 0.10.0
libtpu: 0.0.40
codegen_flags: <defaults>
</compile_context>

<pallas_src>
import functools

import jax
import jax.numpy as jnp
from jax.experimental import pallas as pl
from jax.experimental.pallas import tpu as pltpu

EPS = 1e-6


def _layernorm(x, alpha, bias):
    # x: (rows, D) f32; alpha/bias: (1, D).  PyTorch x.std(-1) is unbiased
    # (N-1), and eps is added to the std (not the variance).
    d = x.shape[-1]
    mean = jnp.mean(x, axis=-1, keepdims=True)
    var = jnp.sum((x - mean) ** 2, axis=-1, keepdims=True) / (d - 1)
    std = jnp.sqrt(var)
    return alpha * (x - mean) / (std + EPS) + bias


# --------------------------------------------------------------------------- #
# Prologue kernel: LayerNorm1 + K/V projection (head-major, bf16), done once
# per sequence row instead of once per query tile.
# --------------------------------------------------------------------------- #
def kv_projection_kernel(x_ref, ln_a_ref, ln_b_ref, wk_ref, wv_ref,
                         k_ref, v_ref, *, num_heads):
    rows, d_model = x_ref.shape            # batch dim squeezed out
    d_k = d_model // num_heads
    bf16 = jnp.bfloat16

    xn = _layernorm(x_ref[...], ln_a_ref[...], ln_b_ref[...]).astype(bf16)
    k = jnp.dot(xn, wk_ref[...], preferred_element_type=jnp.float32)   # (rows, D)
    v = jnp.dot(xn, wv_ref[...], preferred_element_type=jnp.float32)   # (rows, D)
    # Head-major relayout happens once per sequence tile here (hoisted out of
    # the attention kernel).
    k_ref[...] = jnp.swapaxes(k.reshape(rows, num_heads, d_k), 0, 1).astype(k_ref.dtype)
    v_ref[...] = jnp.swapaxes(v.reshape(rows, num_heads, d_k), 0, 1).astype(v_ref.dtype)


# --------------------------------------------------------------------------- #
# Main kernel: per (batch, query-tile): Q projection, attention against the
# precomputed head-major K/V, output projection, residual, LN2 + FFN, residual.
# --------------------------------------------------------------------------- #
def encoder_block_kernel(x_ref, bias_ref, k_ref, v_ref,
                         ln1_a_ref, ln1_b_ref, wq_ref, wo_ref,
                         ln2_a_ref, ln2_b_ref, w1_ref, b1_ref, w2_ref, b2_ref,
                         o_ref, *, num_heads):
    q_tile, d_model = x_ref.shape          # batch dim squeezed out
    d_k = d_model // num_heads
    bf16 = jnp.bfloat16

    x_q = x_ref[...]                                               # (TQ, D) f32

    # ---- sublayer 1: pre-norm self-attention + residual ---------------------
    xn_q = _layernorm(x_q, ln1_a_ref[...], ln1_b_ref[...])         # (TQ, D) f32
    # 1/sqrt(d_k) already folded into wq host-side.
    q = jnp.dot(xn_q.astype(bf16), wq_ref[...],
                preferred_element_type=jnp.float32)                # (TQ, D) f32
    qh = jnp.swapaxes(q.reshape(q_tile, num_heads, d_k), 0, 1)     # (H, TQ, dk)

    scores = jnp.einsum("hqd,hkd->hqk", qh.astype(bf16), k_ref[...],
                        preferred_element_type=jnp.float32)        # (H, TQ, S)
    scores = scores + bias_ref[...][None, :, :]                    # additive mask

    m = jnp.max(scores, axis=-1, keepdims=True)
    e = jnp.exp(scores - m)
    denom = jnp.sum(e, axis=-1, keepdims=True)
    p = e * pl.reciprocal(denom, approx=True)                      # softmax (dropout = id)

    attn = jnp.einsum("hqk,hkd->hqd", p.astype(bf16), v_ref[...],
                      preferred_element_type=jnp.float32)          # (H, TQ, dk)
    attn = jnp.swapaxes(attn, 0, 1).reshape(q_tile, d_model)       # concat heads
    attn_out = jnp.dot(attn.astype(bf16), wo_ref[...],
                       preferred_element_type=jnp.float32)         # (TQ, D)
    x1 = x_q + attn_out                                            # residual

    # ---- sublayer 2: pre-norm feed-forward + residual ------------------------
    xn2 = _layernorm(x1, ln2_a_ref[...], ln2_b_ref[...])
    h1 = jnp.dot(xn2.astype(bf16), w1_ref[...],
                 preferred_element_type=jnp.float32) + b1_ref[...]
    h1 = jnp.maximum(h1, 0.0).astype(bf16)                         # shrink live FFN hidden
    ff = jnp.dot(h1, w2_ref[...],
                 preferred_element_type=jnp.float32) + b2_ref[...]
    o_ref[...] = (x1 + ff).astype(o_ref.dtype)


# --------------------------------------------------------------------------- #
# Wrapper
# --------------------------------------------------------------------------- #
def _pick_tile(s, candidates):
    for t in candidates:
        if s % t == 0:
            return t
    return s


def _pick_q_tile(s, num_heads, budget_bytes=16 << 20):
    # VMEM-aware: scores / exp(scores) / p are each (H, TQ, S) f32 (~3 copies
    # live); keep them under budget_bytes so even v7x's 64 MiB VMEM has room
    # for weights + activations.
    for t in (256, 128, 64, 32, 16, 8):
        if s % t == 0 and 3 * num_heads * t * s * 4 <= budget_bytes:
            return t
    return s


def _vmem_limit_bytes():
    try:
        return int(pltpu.get_tpu_info().vmem_capacity_bytes * 3 // 4)
    except Exception:
        return None  # fall back to the compiler default


def encoder_block(x, mask, params, *, num_heads, q_tile=None, kv_tile=None):
    """x: (B, S, D) f32, mask: (B, 1, S) f32 (1 keep / 0 mask), params: 12 arrays."""
    B, S, D = x.shape
    assert D % num_heads == 0
    d_k = D // num_heads
    (ln1_a, ln1_b, wq, wk, wv, wo, ln2_a, ln2_b, w1, b1, w2, b2) = params

    if q_tile is None:
        q_tile = _pick_q_tile(S, num_heads)
    if kv_tile is None:
        kv_tile = _pick_tile(S, (512, 256, 128, 64, 32, 16, 8))
    assert S % q_tile == 0 and S % kv_tile == 0
    n_q = S // q_tile
    n_kv = S // kv_tile

    bf16 = jnp.bfloat16
    scale = 1.0 / jnp.sqrt(jnp.float32(d_k))

    # Host-side prep: fold the softmax scale into wq, cast MXU weights to bf16
    # (halves HBM traffic and resident VMEM), precompute the additive mask
    # bias once.  LN params and biases stay f32.
    wq_s = (wq * scale).astype(bf16)
    wk_b = wk.astype(bf16)
    wv_b = wv.astype(bf16)
    wo_b = wo.astype(bf16)
    w1_b = w1.astype(bf16)
    w2_b = w2.astype(bf16)
    mask_bias = (mask.astype(jnp.float32) - 1.0) * 1e9             # 0 keep, -1e9 masked

    vmem_limit = _vmem_limit_bytes()
    cparams = pltpu.CompilerParams(
        dimension_semantics=("parallel", "parallel"),
        vmem_limit_bytes=vmem_limit,
    )

    def shared_spec(a):
        nd = a.ndim
        return pl.BlockSpec(a.shape, lambda b, i, _nd=nd: (0,) * _nd)

    # ---- prologue: LN1 + K/V projection, once per sequence row --------------
    k_full, v_full = pl.pallas_call(
        functools.partial(kv_projection_kernel, num_heads=num_heads),
        out_shape=(jax.ShapeDtypeStruct((B, num_heads, S, d_k), bf16),
                   jax.ShapeDtypeStruct((B, num_heads, S, d_k), bf16)),
        grid_spec=pltpu.PrefetchScalarGridSpec(
            num_scalar_prefetch=0,
            grid=(B, n_kv),
            in_specs=[
                pl.BlockSpec((None, kv_tile, D), lambda b, si: (b, si, 0)),
                shared_spec(ln1_a), shared_spec(ln1_b),
                shared_spec(wk_b), shared_spec(wv_b),
            ],
            out_specs=[
                pl.BlockSpec((None, num_heads, kv_tile, d_k),
                             lambda b, si: (b, 0, si, 0)),
                pl.BlockSpec((None, num_heads, kv_tile, d_k),
                             lambda b, si: (b, 0, si, 0)),
            ],
        ),
        compiler_params=cparams,
    )(x, ln1_a, ln1_b, wk_b, wv_b)

    # ---- main kernel: attention + FFN over query tiles -----------------------
    weights = (ln1_a, ln1_b, wq_s, wo_b, ln2_a, ln2_b, w1_b, b1, w2_b, b2)
    in_specs = [
        pl.BlockSpec((None, q_tile, D), lambda b, qi: (b, qi, 0)),           # x tile only
        pl.BlockSpec((None, 1, S), lambda b, qi: (b, 0, 0)),                 # mask bias
        pl.BlockSpec((None, num_heads, S, d_k), lambda b, qi: (b, 0, 0, 0)),  # K
        pl.BlockSpec((None, num_heads, S, d_k), lambda b, qi: (b, 0, 0, 0)),  # V
    ] + [shared_spec(w) for w in weights]
    out_spec = pl.BlockSpec((None, q_tile, D), lambda b, qi: (b, qi, 0))

    return pl.pallas_call(
        functools.partial(encoder_block_kernel, num_heads=num_heads),
        out_shape=jax.ShapeDtypeStruct((B, S, D), jnp.float32),
        grid_spec=pltpu.PrefetchScalarGridSpec(
            num_scalar_prefetch=0,
            grid=(B, n_q),
            in_specs=in_specs,
            out_specs=out_spec,
        ),
        compiler_params=cparams,
    )(x, mask_bias, k_full, v_full, *weights)


# --------------------------------------------------------------------------- #
# Pure-JAX f32 reference mirroring the PyTorch module (eval mode)
# --------------------------------------------------------------------------- #
def encoder_block_reference(x, mask, params, *, num_heads):
    (ln1_a, ln1_b, wq, wk, wv, wo, ln2_a, ln2_b, w1, b1, w2, b2) = params
    B, S, D = x.shape
    d_k = D // num_heads

    def ln(t, a, b):
        mean = jnp.mean(t, axis=-1, keepdims=True)
        var = jnp.sum((t - mean) ** 2, axis=-1, keepdims=True) / (D - 1)
        return a * (t - mean) / (jnp.sqrt(var) + EPS) + b

    xn = ln(x, ln1_a, ln1_b)
    q = xn @ wq
    k = xn @ wk
    v = xn @ wv
    q = q.reshape(B, S, num_heads, d_k).transpose(0, 2, 1, 3)
    k = k.reshape(B, S, num_heads, d_k).transpose(0, 2, 1, 3)
    v = v.reshape(B, S, num_heads, d_k).transpose(0, 2, 1, 3)
    scores = jnp.einsum("bhqd,bhkd->bhqk", q, k) / jnp.sqrt(jnp.float32(d_k))
    scores = jnp.where(mask[:, None, :, :] == 0.0, -1e9, scores)
    p = jax.nn.softmax(scores, axis=-1)
    attn = jnp.einsum("bhqk,bhkd->bhqd", p, v).transpose(0, 2, 1, 3).reshape(B, S, D)
    x = x + attn @ wo

    xn2 = ln(x, ln2_a, ln2_b)
    ff = jnp.maximum(xn2 @ w1 + b1, 0.0) @ w2 + b2
    return x + ff


def init_params(key, d_model, d_ff):
    ks = jax.random.split(key, 6)
    scale = 0.02
    ln1_a = jnp.ones((1, d_model), jnp.float32)
    ln1_b = jnp.zeros((1, d_model), jnp.float32)
    wq = scale * jax.random.normal(ks[0], (d_model, d_model), jnp.float32)
    wk = scale * jax.random.normal(ks[1], (d_model, d_model), jnp.float32)
    wv = scale * jax.random.normal(ks[2], (d_model, d_model), jnp.float32)
    wo = scale * jax.random.normal(ks[3], (d_model, d_model), jnp.float32)
    ln2_a = jnp.ones((1, d_model), jnp.float32)
    ln2_b = jnp.zeros((1, d_model), jnp.float32)
    w1 = scale * jax.random.normal(ks[4], (d_model, d_ff), jnp.float32)
    b1 = jnp.zeros((1, d_ff), jnp.float32)
    w2 = scale * jax.random.normal(ks[5], (d_ff, d_model), jnp.float32)
    b2 = jnp.zeros((1, d_model), jnp.float32)
    return (ln1_a, ln1_b, wq, wk, wv, wo, ln2_a, ln2_b, w1, b1, w2, b2)


if __name__ == "__main__":
    B, S, D, H, D_FF = 2, 16, 32, 4, 64
    key = jax.random.PRNGKey(0)
    kx, kp = jax.random.split(key)

    x = jax.random.normal(kx, (B, S, D), jnp.float32)
    # src_mask: 1 = attend, 0 = masked (pad the last 2 positions of batch 1).
    mask = jnp.ones((B, 1, S), jnp.float32)
    mask = mask.at[1, 0, S - 2:].set(0.0)

    params = init_params(kp, D, D_FF)

    # q_tile=8 -> main grid (B, 2): exercises the query-tile axis in the demo.
    out = encoder_block(x, mask, params, num_heads=H, q_tile=8)
    out = jax.block_until_ready(out)

    ref = encoder_block_reference(x, mask, params, num_heads=H)
    assert out.shape == (B, S, D)
    # bf16 MXU inputs (kernel) vs pure-f32 reference -> slightly looser tolerance.
    assert jnp.allclose(out, ref, atol=1e-2, rtol=1e-2), "mismatch vs reference"

    print("KERNEL_OK")
</pallas_src>

<mosaic_0001>
module attributes {stable_mosaic.version = 11 : i64} {
  func.func @kv_projection_kernel(%arg0: i32, %arg1: i32, %arg2: memref<1x16x32xf32, #tpu.memory_space<vmem>>, %arg3: memref<1x32xf32, #tpu.memory_space<vmem>>, %arg4: memref<1x32xf32, #tpu.memory_space<vmem>>, %arg5: memref<32x32xbf16, #tpu.memory_space<vmem>>, %arg6: memref<32x32xbf16, #tpu.memory_space<vmem>>, %arg7: memref<1x4x16x8xbf16, #tpu.memory_space<vmem>>, %arg8: memref<1x4x16x8xbf16, #tpu.memory_space<vmem>>) attributes {dimension_semantics = [#tpu.dimension_semantics<parallel>, #tpu.dimension_semantics<parallel>], iteration_bounds = array<i64: 2, 1>, scalar_prefetch = 0 : i64, scratch_operands = 0 : i64, tpu.core_type = #tpu.core_type<tc>, window_params = [{transform_indices = @transform_0, window_bounds = array<i64: 1, 16, 32>}, {pipeline_mode = #tpu.pipeline_mode<synchronous>, transform_indices = @transform_1, window_bounds = array<i64: 1, 32>}, {pipeline_mode = #tpu.pipeline_mode<synchronous>, transform_indices = @transform_2, window_bounds = array<i64: 1, 32>}, {pipeline_mode = #tpu.pipeline_mode<synchronous>, transform_indices = @transform_3, window_bounds = array<i64: 32, 32>}, {pipeline_mode = #tpu.pipeline_mode<synchronous>, transform_indices = @transform_4, window_bounds = array<i64: 32, 32>}, {transform_indices = @transform_5, window_bounds = array<i64: 1, 4, 16, 8>}, {transform_indices = @transform_6, window_bounds = array<i64: 1, 4, 16, 8>}]} {
    %c0 = arith.constant 0 : index
    %c0_0 = arith.constant 0 : index
    %c0_1 = arith.constant 0 : index
    %0 = vector.load %arg2[%c0, %c0_0, %c0_1] : memref<1x16x32xf32, #tpu.memory_space<vmem>>, vector<1x16x32xf32>
    %1 = vector.shape_cast %0 : vector<1x16x32xf32> to vector<16x32xf32>
    %c0_2 = arith.constant 0 : index
    %c0_3 = arith.constant 0 : index
    %2 = vector.load %arg3[%c0_2, %c0_3] : memref<1x32xf32, #tpu.memory_space<vmem>>, vector<1x32xf32>
    %c0_4 = arith.constant 0 : index
    %c0_5 = arith.constant 0 : index
    %3 = vector.load %arg4[%c0_4, %c0_5] : memref<1x32xf32, #tpu.memory_space<vmem>>, vector<1x32xf32>
    %cst = arith.constant dense<0.000000e+00> : vector<16xf32>
    %4 = vector.multi_reduction <add>, %1, %cst [1] : vector<16x32xf32> to vector<16xf32>
    %5 = vector.shape_cast %4 : vector<16xf32> to vector<16x1xf32>
    %cst_6 = arith.constant 3.200000e+01 : f32
    %6 = vector.broadcast %cst_6 : f32 to vector<16x1xf32>
    %7 = arith.divf %5, %6 : vector<16x1xf32>
    %8 = vector.broadcast %7 : vector<16x1xf32> to vector<16x32xf32>
    %9 = arith.subf %1, %8 : vector<16x32xf32>
    %10 = arith.mulf %9, %9 : vector<16x32xf32>
    %cst_7 = arith.constant dense<0.000000e+00> : vector<16xf32>
    %11 = vector.multi_reduction <add>, %10, %cst_7 [1] : vector<16x32xf32> to vector<16xf32>
    %12 = vector.shape_cast %11 : vector<16xf32> to vector<16x1xf32>
    %cst_8 = arith.constant 3.100000e+01 : f32
    %13 = vector.broadcast %cst_8 : f32 to vector<16x1xf32>
    %14 = arith.divf %12, %13 : vector<16x1xf32>
    %15 = math.sqrt %14 : vector<16x1xf32>
    %16 = vector.broadcast %7 : vector<16x1xf32> to vector<16x32xf32>
    %17 = arith.subf %1, %16 : vector<16x32xf32>
    %18 = vector.broadcast %2 : vector<1x32xf32> to vector<16x32xf32>
    %19 = arith.mulf %18, %17 : vector<16x32xf32>
    %cst_9 = arith.constant 9.99999997E-7 : f32
    %20 = vector.broadcast %cst_9 : f32 to vector<16x1xf32>
    %21 = arith.addf %15, %20 : vector<16x1xf32>
    %22 = vector.broadcast %21 : vector<16x1xf32> to vector<16x32xf32>
    %23 = arith.divf %19, %22 : vector<16x32xf32>
    %24 = vector.broadcast %3 : vector<1x32xf32> to vector<16x32xf32>
    %25 = arith.addf %23, %24 : vector<16x32xf32>
    %26 = arith.truncf %25 : vector<16x32xf32> to vector<16x32xbf16>
    %c0_10 = arith.constant 0 : index
    %c0_11 = arith.constant 0 : index
    %27 = vector.load %arg5[%c0_10, %c0_11] : memref<32x32xbf16, #tpu.memory_space<vmem>>, vector<32x32xbf16>
    %cst_12 = arith.constant dense<0.000000e+00> : vector<16x32xf32>
    %28 = tpu.matmul %26, %27, %cst_12 {dimension_numbers = #tpu.dot_dimension_numbers<[1], [0], [0], [1], [0, 0, 1, 1], [], []>} : vector<16x32xbf16>, vector<32x32xbf16>, vector<16x32xf32> -> vector<16x32xf32>
    %c0_13 = arith.constant 0 : index
    %c0_14 = arith.constant 0 : index
    %29 = vector.load %arg6[%c0_13, %c0_14] : memref<32x32xbf16, #tpu.memory_space<vmem>>, vector<32x32xbf16>
    %cst_15 = arith.constant dense<0.000000e+00> : vector<16x32xf32>
    %30 = tpu.matmul %26, %29, %cst_15 {dimension_numbers = #tpu.dot_dimension_numbers<[1], [0], [0], [1], [0, 0, 1, 1], [], []>} : vector<16x32xbf16>, vector<32x32xbf16>, vector<16x32xf32> -> vector<16x32xf32>
    %31 = vector.shape_cast %28 : vector<16x32xf32> to vector<16x4x8xf32>
    %32 = tpu.transpose %31, [1, 0, 2] : vector<16x4x8xf32> -> vector<4x16x8xf32>
    %33 = arith.truncf %32 : vector<4x16x8xf32> to vector<4x16x8xbf16>
    %c0_16 = arith.constant 0 : index
    %c0_17 = arith.constant 0 : index
    %c0_18 = arith.constant 0 : index
    %c0_19 = arith.constant 0 : index
    %34 = vector.load %arg7[%c0_16, %c0_17, %c0_18, %c0_19] : memref<1x4x16x8xbf16, #tpu.memory_space<vmem>>, vector<1x4x16x8xbf16>
    %35 = vector.shape_cast %34 : vector<1x4x16x8xbf16> to vector<4x16x8xbf16>
    %36 = vector.shape_cast %33 : vector<4x16x8xbf16> to vector<1x4x16x8xbf16>
    tpu.vector_store %arg7[%c0_16, %c0_17, %c0_18, %c0_19], %36 {strides = array<i32>} : memref<1x4x16x8xbf16, #tpu.memory_space<vmem>>, vector<1x4x16x8xbf16>,
    %37 = vector.shape_cast %30 : vector<16x32xf32> to vector<16x4x8xf32>
    %38 = tpu.transpose %37, [1, 0, 2] : vector<16x4x8xf32> -> vector<4x16x8xf32>
    %39 = arith.truncf %38 : vector<4x16x8xf32> to vector<4x16x8xbf16>
    %c0_20 = arith.constant 0 : index
    %c0_21 = arith.constant 0 : index
    %c0_22 = arith.constant 0 : index
    %c0_23 = arith.constant 0 : index
    %40 = vector.load %arg8[%c0_20, %c0_21, %c0_22, %c0_23] : memref<1x4x16x8xbf16, #tpu.memory_space<vmem>>, vector<1x4x16x8xbf16>
    %41 = vector.shape_cast %40 : vector<1x4x16x8xbf16> to vector<4x16x8xbf16>
    %42 = vector.shape_cast %39 : vector<4x16x8xbf16> to vector<1x4x16x8xbf16>
    tpu.vector_store %arg8[%c0_20, %c0_21, %c0_22, %c0_23], %42 {strides = array<i32>} : memref<1x4x16x8xbf16, #tpu.memory_space<vmem>>, vector<1x4x16x8xbf16>,
    return
  }
  func.func @transform_0(%arg0: i32, %arg1: i32) -> (i32, i32, i32) {
    %c0_i32 = arith.constant 0 : i32
    %c0_i32_0 = arith.constant 0 : i32
    return %arg0, %arg1, %c0_i32 : i32, i32, i32
  }
  func.func @transform_1(%arg0: i32, %arg1: i32) -> (i32, i32) {
    %c0_i32 = arith.constant 0 : i32
    %c0_i32_0 = arith.constant 0 : i32
    %c0_i32_1 = arith.constant 0 : i32
    return %c0_i32, %c0_i32_0 : i32, i32
  }
  func.func @transform_2(%arg0: i32, %arg1: i32) -> (i32, i32) {
    %c0_i32 = arith.constant 0 : i32
    %c0_i32_0 = arith.constant 0 : i32
    %c0_i32_1 = arith.constant 0 : i32
    return %c0_i32, %c0_i32_0 : i32, i32
  }
  func.func @transform_3(%arg0: i32, %arg1: i32) -> (i32, i32) {
    %c0_i32 = arith.constant 0 : i32
    %c0_i32_0 = arith.constant 0 : i32
    %c0_i32_1 = arith.constant 0 : i32
    return %c0_i32, %c0_i32_0 : i32, i32
  }
  func.func @transform_4(%arg0: i32, %arg1: i32) -> (i32, i32) {
    %c0_i32 = arith.constant 0 : i32
    %c0_i32_0 = arith.constant 0 : i32
    %c0_i32_1 = arith.constant 0 : i32
    return %c0_i32, %c0_i32_0 : i32, i32
  }
  func.func @transform_5(%arg0: i32, %arg1: i32) -> (i32, i32, i32, i32) {
    %c0_i32 = arith.constant 0 : i32
    %c0_i32_0 = arith.constant 0 : i32
    %c0_i32_1 = arith.constant 0 : i32
    return %arg0, %c0_i32, %arg1, %c0_i32_0 : i32, i32, i32, i32
  }
  func.func @transform_6(%arg0: i32, %arg1: i32) -> (i32, i32, i32, i32) {
    %c0_i32 = arith.constant 0 : i32
    %c0_i32_0 = arith.constant 0 : i32
    %c0_i32_1 = arith.constant 0 : i32
    return %arg0, %c0_i32, %arg1, %c0_i32_0 : i32, i32, i32, i32
  }
}

</mosaic_0001>

<llo_original>
// kernel: tpu_custom_call.1
$region0: #{tpu_custom_call.1}
  #allocation0 [shape = 'u32[]', space=smem, size = 0x4, offset = 0x4, fixed_abs, tag = 'smem constant byte address 0x4 - core index']
  #allocation1 [shape = 'u32[144,128]{1,0:T(1,128)}', space=vmem, size = 0x12000, scoped, tag = 'internal scratch']
  %s0 = inlined_call_operand.hbm [shape: f32[2,16,32], index: 0, kind: input, shape index: {}]
  %s1 = inlined_call_operand.vmem [shape: f32[1,32], index: 1, kind: input, shape index: {}]
  %s2 = inlined_call_operand.vmem [shape: f32[1,32], index: 2, kind: input, shape index: {}]
  %s3 = inlined_call_operand.hbm [shape: bf16[32,32], index: 3, kind: input, shape index: {}]
  %s4 = inlined_call_operand.hbm [shape: bf16[32,32], index: 4, kind: input, shape index: {}]
  %s5 = inlined_call_operand.vmem [shape: bf16[2,4,16,8], index: 5, kind: output, shape index: {0}]
  %s6 = inlined_call_operand.vmem [shape: bf16[2,4,16,8], index: 6, kind: output, shape index: {1}]
  %7 = xla_tuple %s5, %s6
  %s8 = sld [smem:[#allocation0]]
  $region73: #{tpu_custom_call.1} parent=0
    _
  %s10 = ssub.s32 1, %s8
  %s11 = scalar_select 0, %s10, %s8
  $region1: #{tpu_custom_call.1} parent=0
    #allocation2 [shape = 'u8[16384]{0}', space=vmem, size = 0x4000, scoped, tag = 'input window, operand 0']
    #allocation3 [shape = 's32[2]{0}', space=sflag, size = 0x8, scoped, tag = 'scoped memory for tpu_custom_call.1']
    #allocation4 [shape = 'u8[8192]{0}', space=vmem, size = 0x2000, scoped, tag = 'input window, operand 3, single buffered']
    #allocation5 [shape = 's32[1]{0}', space=sflag, size = 0x4, scoped, tag = 'scoped memory for tpu_custom_call.1']
    #allocation6 [shape = 'u8[8192]{0}', space=vmem, size = 0x2000, scoped, tag = 'input window, operand 4, single buffered']
    %12 = vsyncpa [#allocation3], 0
    %s13 = scalar_lea.sflag [#allocation3], 1
    %14 = vsyncpa %s13, 0
    %15 = vsyncpa [#allocation5], 0
    loop: start=0, step=1, limit=4
    $region2: #{tpu_custom_call.1} parent=1 // loop_pre_header
      _
    $region3: #{tpu_custom_call.1} parent=1 // loop_header
      %s17 = sphi 0, %s21
      %p18 = scmp.ge.s32.totalorder %s17, 4
      %s24 = sphi 0, %s36
      %s25 = sphi 0, %s32
      %s26 = sphi 0, %s24
      %s27 = sphi 0, %s25
      %s28 = sphi 0, %s26
      %s29 = sphi 0, %s27
      %s41 = sphi 0, %s43
      %s44 = sphi 0, %s41
      %s45 = sphi 0, %s44
      %s61 = sphi 0, %s45
      %s65 = sphi 0, %s65
      %s67 = sphi 0, %s65
      %s68 = sphi 0, %s67
      %s82 = sphi 0, %s68
      %s86 = sphi 0, %s86
      %s88 = sphi 0, %s86
      %s89 = sphi 0, %s88
      %s103 = sphi 0, %s89
      %s107 = sphi 0, %s107
      %s109 = sphi 0, %s107
      %s110 = sphi 0, %s109
      %s124 = sphi 0, %s110
      %s128 = sphi 0, %s128
      %s130 = sphi 0, %s128
      %s131 = sphi 0, %s130
      %s145 = sphi 0, %s131
      %s153 = sphi 0, %s155
      %s156 = sphi 0, %s153
      %s157 = sphi 0, %s156
      %s173 = sphi 0, %s157
      %s181 = sphi 0, %s183
      %s184 = sphi 0, %s181
      %s185 = sphi 0, %s184
      %s201 = sphi 0, %s185
    $region4: #{tpu_custom_call.1} parent=1 // loop_header_branch
      %20 = sbr.rel (%p18) target = $region8
    $region5: #{tpu_custom_call.1} parent=1 // loop_body
      %s22 = ssub.s32 %s17, 1
      %s23 = ssub.s32 %s17, 2
      %s30 = sadd.s32 1, %s25
      %p31 = scmp.ge.s32.totalorder %s30, 1
      %s32 = scalar_select %p31, 0, %s30
      %s33 = sadd.s32 1, %s24
      %s34 = scalar_select %p31, %s33, %s24
      %p35 = scmp.ge.s32.totalorder %s34, 2
      %s36 = scalar_select %p35, 0, %s34
      %s37 = ssub.s32 %s24, %s36
      %s38 = ssub.s32 %s25, %s32
      %s39 = sor.u32 %s37, %s38
      %p40 = scmp.eq.s32.totalorder %s39, 0
      %s42 = sadd.s32 %s41, 1
      %s43 = scalar_select %p40, %s41, %s42
      %p46 = pneg %p40
      %p47 = scmp.eq.s32.totalorder %s17, 1
      %p48 = por %p46, %p47
      %p49 = scmp.ne.s32.totalorder %s41, %s44
      %p50 = scmp.eq.s32.totalorder %s17, 0
      %p51 = por %p49, %p50
      %p52 = scmp.ne.s32.totalorder %s41, %s44
      %p53 = scmp.eq.s32.totalorder %s22, 1
      %p54 = por %p52, %p53
      %p55 = scmp.ne.s32.totalorder %s44, %s45
      %p56 = scmp.eq.s32.totalorder %s22, 0
      %p57 = por %p55, %p56
      %p58 = scmp.ne.s32.totalorder %s44, %s45
      %p59 = scmp.eq.s32.totalorder %s23, 1
      %p60 = por %p58, %p59
      %p62 = scmp.ne.s32.totalorder %s45, %s61
      %p63 = scmp.eq.s32.totalorder %s23, 0
      %p64 = por %p62, %p63
      %s66 = sadd.s32 %s65, 1
      %p69 = scmp.eq.s32.totalorder %s17, 1
      %p70 = scmp.ne.s32.totalorder %s65, %s67
      %p71 = scmp.eq.s32.totalorder %s17, 0
      %p72 = por %p70, %p71
      %p73 = scmp.ne.s32.totalorder %s65, %s67
      %p74 = scmp.eq.s32.totalorder %s22, 1
      %p75 = por %p73, %p74
      %p76 = scmp.ne.s32.totalorder %s67, %s68
      %p77 = scmp.eq.s32.totalorder %s22, 0
      %p78 = por %p76, %p77
      %p79 = scmp.ne.s32.totalorder %s67, %s68
      %p80 = scmp.eq.s32.totalorder %s23, 1
      %p81 = por %p79, %p80
      %p83 = scmp.ne.s32.totalorder %s68, %s82
      %p84 = scmp.eq.s32.totalorder %s23, 0
      %p85 = por %p83, %p84
      %s87 = sadd.s32 %s86, 1
      %p90 = scmp.eq.s32.totalorder %s17, 1
      %p91 = scmp.ne.s32.totalorder %s86, %s88
      %p92 = scmp.eq.s32.totalorder %s17, 0
      %p93 = por %p91, %p92
      %p94 = scmp.ne.s32.totalorder %s86, %s88
      %p95 = scmp.eq.s32.totalorder %s22, 1
      %p96 = por %p94, %p95
      %p97 = scmp.ne.s32.totalorder %s88, %s89
      %p98 = scmp.eq.s32.totalorder %s22, 0
      %p99 = por %p97, %p98
      %p100 = scmp.ne.s32.totalorder %s88, %s89
      %p101 = scmp.eq.s32.totalorder %s23, 1
      %p102 = por %p100, %p101
      %p104 = scmp.ne.s32.totalorder %s89, %s103
      %p105 = scmp.eq.s32.totalorder %s23, 0
      %p106 = por %p104, %p105
      %s108 = sadd.s32 %s107, 1
      %p111 = scmp.eq.s32.totalorder %s17, 1
      %p112 = scmp.ne.s32.totalorder %s107, %s109
      %p113 = scmp.eq.s32.totalorder %s17, 0
      %p114 = por %p112, %p113
      %p115 = scmp.ne.s32.totalorder %s107, %s109
      %p116 = scmp.eq.s32.totalorder %s22, 1
      %p117 = por %p115, %p116
      %p118 = scmp.ne.s32.totalorder %s109, %s110
      %p119 = scmp.eq.s32.totalorder %s22, 0
      %p120 = por %p118, %p119
      %p121 = scmp.ne.s32.totalorder %s109, %s110
      %p122 = scmp.eq.s32.totalorder %s23, 1
      %p123 = por %p121, %p122
      %p125 = scmp.ne.s32.totalorder %s110, %s124
      %p126 = scmp.eq.s32.totalorder %s23, 0
      %p127 = por %p125, %p126
      %s129 = sadd.s32 %s128, 1
      %p132 = scmp.eq.s32.totalorder %s17, 1
      %p133 = scmp.ne.s32.totalorder %s128, %s130
      %p134 = scmp.eq.s32.totalorder %s17, 0
      %p135 = por %p133, %p134
      %p136 = scmp.ne.s32.totalorder %s128, %s130
      %p137 = scmp.eq.s32.totalorder %s22, 1
      %p138 = por %p136, %p137
      %p139 = scmp.ne.s32.totalorder %s130, %s131
      %p140 = scmp.eq.s32.totalorder %s22, 0
      %p141 = por %p139, %p140
      %p142 = scmp.ne.s32.totalorder %s130, %s131
      %p143 = scmp.eq.s32.totalorder %s23, 1
      %p144 = por %p142, %p143
      %p146 = scmp.ne.s32.totalorder %s131, %s145
      %p147 = scmp.eq.s32.totalorder %s23, 0
      %p148 = por %p146, %p147
      %s149 = ssub.s32 %s24, %s36
      %s150 = ssub.s32 %s25, %s32
      %s151 = sor.u32 %s149, %s150
      %p152 = scmp.eq.s32.totalorder %s151, 0
      %s154 = sadd.s32 %s153, 1
      %s155 = scalar_select %p152, %s153, %s154
      %p158 = pneg %p152
      %p159 = scmp.eq.s32.totalorder %s17, 1
      %p160 = por %p158, %p159
      %p161 = scmp.ne.s32.totalorder %s153, %s156
      %p162 = scmp.eq.s32.totalorder %s17, 0
      %p163 = por %p161, %p162
      %p164 = scmp.ne.s32.totalorder %s153, %s156
      %p165 = scmp.eq.s32.totalorder %s22, 1
      %p166 = por %p164, %p165
      %p167 = scmp.ne.s32.totalorder %s156, %s157
      %p168 = scmp.eq.s32.totalorder %s22, 0
      %p169 = por %p167, %p168
      %p170 = scmp.ne.s32.totalorder %s156, %s157
      %p171 = scmp.eq.s32.totalorder %s23, 1
      %p172 = por %p170, %p171
      %p174 = scmp.ne.s32.totalorder %s157, %s173
      %p175 = scmp.eq.s32.totalorder %s23, 0
      %p176 = por %p174, %p175
      %s177 = ssub.s32 %s24, %s36
      %s178 = ssub.s32 %s25, %s32
      %s179 = sor.u32 %s177, %s178
      %p180 = scmp.eq.s32.totalorder %s179, 0
      %s182 = sadd.s32 %s181, 1
      %s183 = scalar_select %p180, %s181, %s182
      %p186 = pneg %p180
      %p187 = scmp.eq.s32.totalorder %s17, 1
      %p188 = por %p186, %p187
      %p189 = scmp.ne.s32.totalorder %s181, %s184
      %p190 = scmp.eq.s32.totalorder %s17, 0
      %p191 = por %p189, %p190
      %p192 = scmp.ne.s32.totalorder %s181, %s184
      %p193 = scmp.eq.s32.totalorder %s22, 1
      %p194 = por %p192, %p193
      %p195 = scmp.ne.s32.totalorder %s184, %s185
      %p196 = scmp.eq.s32.totalorder %s22, 0
      %p197 = por %p195, %p196
      %p198 = scmp.ne.s32.totalorder %s184, %s185
      %p199 = scmp.eq.s32.totalorder %s23, 1
      %p200 = por %p198, %p199
      %p202 = scmp.ne.s32.totalorder %s185, %s201
      %p203 = scmp.eq.s32.totalorder %s23, 0
      %p204 = por %p202, %p203
      %p205 = scmp.le.s32.totalorder 1, %s17
      %p206 = scmp.lt.s32.totalorder %s17, 3
      %p207 = pnand %p205, %p206
      %p208 = pneg %p207
      // Predicated region
      $region9: #{tpu_custom_call.1} parent=5 // pred_check
        _
      $region10: #{tpu_custom_call.1} parent=5 // pred_check_branch
        %210 = sbr.rel (%p207) target = $region12
      $region11: #{tpu_custom_call.1} parent=5 // pred_region
        %s211 = ssub.s32 %s17, 1
        // Predicated region
        $region13: #{tpu_custom_call.1} parent=11 // pred_check
          %p212 = pneg %p78
        $region14: #{tpu_custom_call.1} parent=11 // pred_check_branch
          %214 = sbr.rel (%p212) target = $region16
        $region15: #{tpu_custom_call.1} parent=11 // pred_region
          _
        $region16: #{tpu_custom_call.1} parent=11 // pred_fallthru
          _
        // Predicated region
        $region17: #{tpu_custom_call.1} parent=11 // pred_check
          %p215 = pneg %p99
        $region18: #{tpu_custom_call.1} parent=11 // pred_check_branch
          %217 = sbr.rel (%p215) target = $region20
        $region19: #{tpu_custom_call.1} parent=11 // pred_region
          _
        $region20: #{tpu_custom_call.1} parent=11 // pred_fallthru
          _
        // Predicated region
        $region21: #{tpu_custom_call.1} parent=11 // pred_check
          %p218 = pneg %p120
        $region22: #{tpu_custom_call.1} parent=11 // pred_check_branch
          %220 = sbr.rel (%p218) target = $region24
        $region23: #{tpu_custom_call.1} parent=11 // pred_region
          %s222 = ssub.s32 256, 256
          %223 = vsyncadd [#allocation5], %s222
          %s224 = sshll.u32 [#allocation4], 4
          %s225 = int_to_ptr.vmem [resolvable:$true] %s224
          %230 = dma.hbm_to_vmem [thread:$0]  %s3, 256, %s225, [#allocation5], 64, 64, 4
        $region24: #{tpu_custom_call.1} parent=11 // pred_fallthru
          _
        // Predicated region
        $region25: #{tpu_custom_call.1} parent=11 // pred_check
          %p231 = pneg %p141
        $region26: #{tpu_custom_call.1} parent=11 // pred_check_branch
          %233 = sbr.rel (%p231) target = $region28
        $region27: #{tpu_custom_call.1} parent=11 // pred_region
          %s235 = ssub.s32 256, 256
          %236 = vsyncadd [#allocation5], %s235
          %s237 = sshll.u32 [#allocation6], 4
          %s238 = int_to_ptr.vmem [resolvable:$true] %s237
          %243 = dma.hbm_to_vmem [thread:$0]  %s4, 256, %s238, [#allocation5], 64, 64, 4
        $region28: #{tpu_custom_call.1} parent=11 // pred_fallthru
          _
      $region12: #{tpu_custom_call.1} parent=5 // pred_fallthru
        _
      %p244 = scmp.lt.s32.totalorder %s17, 2
      // Predicated region
      $region29: #{tpu_custom_call.1} parent=5 // pred_check
        %p245 = pneg %p244
      $region30: #{tpu_custom_call.1} parent=5 // pred_check_branch
        %247 = sbr.rel (%p245) target = $region32
      $region31: #{tpu_custom_call.1} parent=5 // pred_region
        // Predicated region
        $region33: #{tpu_custom_call.1} parent=31 // pred_check
          %p248 = pneg %p51
        $region34: #{tpu_custom_call.1} parent=31 // pred_check_branch
          %250 = sbr.rel (%p248) target = $region36
        $region35: #{tpu_custom_call.1} parent=31 // pred_region
          %s251 = sand.u32 %s41, 1
          %s252 = scalar_lea.sflag [#allocation3], %s251
          %s253 = sand.u32 %s41, 1
          %s254 = smul.addr %s253, 16
          %s255 = scalar_lea.vmem [#allocation2], %s254
          %s256 = smul.u32 2, %s25
          %s258 = ssub.s32 256, 256
          %259 = vsyncadd %s252, %s258
          %s260 = smul.addr %s24, 2
          %s261 = sadd.s32 %s256, %s260
          %s262 = smul.addr %s261, 128
          %s263 = scalar_lea.hbm %s0, %s262
          %s264 = sshll.u32 %s255, 4
          %s265 = int_to_ptr.vmem [resolvable:$true] %s264
          %270 = dma.hbm_to_vmem [thread:$0]  %s263, 256, %s265, %s252, 128, 128, 8
        $region36: #{tpu_custom_call.1} parent=31 // pred_fallthru
          _
      $region32: #{tpu_custom_call.1} parent=5 // pred_fallthru
        _
      %p271 = scmp.le.s32.totalorder 1, %s17
      %p272 = scmp.lt.s32.totalorder %s17, 3
      %p273 = pnand %p271, %p272
      %p274 = pneg %p273
      // Predicated region
      $region37: #{tpu_custom_call.1} parent=5 // pred_check
        _
      $region38: #{tpu_custom_call.1} parent=5 // pred_check_branch
        %276 = sbr.rel (%p273) target = $region40
      $region39: #{tpu_custom_call.1} parent=5 // pred_region
        %s277 = ssub.s32 %s17, 1
        %s278 = sand.u32 %s44, 1
        %s279 = scalar_lea.sflag [#allocation3], %s278
        %s280 = sand.u32 %s44, 1
        %s281 = smul.addr %s280, 16
        %s282 = scalar_lea.vmem [#allocation2], %s281
        // Predicated region
        $region41: #{tpu_custom_call.1} parent=39 // pred_check
          %p283 = pneg %p57
        $region42: #{tpu_custom_call.1} parent=39 // pred_check_branch
          %285 = sbr.rel (%p283) target = $region44
        $region43: #{tpu_custom_call.1} parent=39 // pred_region
          %286 = dma.done %s279, 256
        $region44: #{tpu_custom_call.1} parent=39 // pred_fallthru
          _
        // Predicated region
        $region45: #{tpu_custom_call.1} parent=39 // pred_check
          %p287 = pneg %p120
        $region46: #{tpu_custom_call.1} parent=39 // pred_check_branch
          %289 = sbr.rel (%p287) target = $region48
        $region47: #{tpu_custom_call.1} parent=39 // pred_region
          %290 = dma.done [#allocation5], 256
        $region48: #{tpu_custom_call.1} parent=39 // pred_fallthru
          _
        // Predicated region
        $region49: #{tpu_custom_call.1} parent=39 // pred_check
          %p291 = pneg %p141
        $region50: #{tpu_custom_call.1} parent=39 // pred_check_branch
          %293 = sbr.rel (%p291) target = $region52
        $region51: #{tpu_custom_call.1} parent=39 // pred_region
          %294 = dma.done [#allocation5], 256
        $region52: #{tpu_custom_call.1} parent=39 // pred_fallthru
          _
        %s295 = sand.u32 %s44, 1
        %s296 = scalar_lea.sflag [#allocation3], %s295
        %s297 = sand.u32 %s44, 1
        %s298 = smul.addr %s297, 16
        %s299 = scalar_lea.vmem [#allocation2], %s298
        %p300 = pneg %p57
        %p301 = pneg %p54
        %p302 = pneg %p78
        %p303 = pneg %p75
        %p304 = pneg %p99
        %p305 = pneg %p96
        %p306 = pneg %p120
        %p307 = pneg %p117
        %p308 = pneg %p141
        %p309 = pneg %p138
        %p310 = pneg %p169
        %p311 = pneg %p166
        %s312 = smul.u32 2, %s27
        %p313 = scmp.lt.s32.totalorder %s26, 1
        %s314 = scalar_select %p313, %s26, 1
        %p315 = scmp.lt.s32.totalorder %s312, 1
        %s316 = scalar_select %p315, %s312, 1
        %s317 = smul.addr %s314, 8
        %s318 = sadd.s32 %s316, %s317
        %s319 = smul.addr %s318, 4
        %s320 = scalar_lea.vmem %s5, %s319
        %p321 = pneg %p197
        %p322 = pneg %p194
        %s323 = smul.u32 2, %s27
        %p324 = scmp.lt.s32.totalorder %s26, 1
        %s325 = scalar_select %p324, %s26, 1
        %p326 = scmp.lt.s32.totalorder %s323, 1
        %s327 = scalar_select %p326, %s323, 1
        %s328 = smul.addr %s325, 8
        %s329 = sadd.s32 %s327, %s328
        %s330 = smul.addr %s329, 4
        %s331 = scalar_lea.vmem %s6, %s330
        %s332 = smul.u32 2, %s27
        %s333 = smul.u32 2, %s27
        %p334 = scmp.lt.s32.totalorder %s26, 1
        %s335 = scalar_select %p334, %s26, 1
        %p336 = scmp.lt.s32.totalorder %s333, 1
        %s337 = scalar_select %p336, %s333, 1
        %s338 = smul.addr %s335, 8
        %s339 = sadd.s32 %s337, %s338
        %s340 = smul.addr %s339, 4
        %s341 = scalar_lea.vmem %s5, %s340
        %s342 = smul.u32 2, %s27
        %s343 = smul.u32 2, %s27
        %p344 = scmp.lt.s32.totalorder %s26, 1
        %s345 = scalar_select %p344, %s26, 1
        %p346 = scmp.lt.s32.totalorder %s343, 1
        %s347 = scalar_select %p346, %s343, 1
        %s348 = smul.addr %s345, 8
        %s349 = sadd.s32 %s347, %s348
        %s350 = smul.addr %s349, 4
        %s351 = scalar_lea.vmem %s6, %s350
        %s352 = smul.u32 2, %s27
        %v354 = vld [vmem:[%s282] sm:$0xff]
        %v355 = vld [vmem:[%s282 + $0x8] sm:$0xff]
        %v356 = vld [vmem:[%s1] sm:$0x1]
        %v357 = vld [vmem:[%s2] sm:$0x1]
        %vm358 = vcmask 261120
        %v359 = vsel %vm358, %v354, 0.0
        %360 = vadd.xlane.f32.xlu0 %v359
        %v361 = vpop.xlane.xlu0 %360
        %v362 = vsel %vm358, %v355, 0.0
        %363 = vadd.xlane.f32.xlu0 %v362
        %v364 = vpop.xlane.xlu0 %363
        %v365 = vrcp.pop 32.0
        %v366 = vmul.f32 %v361, %v365
        %v367 = vmul.f32 %v364, %v365
        %v368 = vsub.f32 %v354, %v366
        %v369 = vsub.f32 %v355, %v367
        %v370 = vmul.f32 %v368, %v368
        %v371 = vmul.f32 %v369, %v369
        %v372 = vsel %vm358, %v370, 0.0
        %373 = vadd.xlane.f32.xlu0 %v372
        %v374 = vpop.xlane.xlu0 %373
        %v375 = vsel %vm358, %v371, 0.0
        %376 = vadd.xlane.f32.xlu0 %v375
        %v377 = vpop.xlane.xlu0 %376
        %v378 = vrcp.pop 31.0
        %v379 = vmul.f32 %v374, %v378
        %v380 = vmul.f32 %v377, %v378
        %v381 = vrsqrt.pop %v379
        %v382 = vmul.f32 %v379, %v381
        %vm383 = vcmp.eq.f32.partialorder %v379, inf
        %v384 = vsel %vm383, %v379, %v382
        %vm385 = vcmp.eq.f32.partialorder %v379, 0.0
        %v386 = vand.u32 %v379, 2147483648
        %v387 = vsel %vm385, %v386, %v384
        %v388 = vrsqrt.pop %v380
        %v389 = vmul.f32 %v380, %v388
        %vm390 = vcmp.eq.f32.partialorder %v380, inf
        %v391 = vsel %vm390, %v380, %v389
        %vm392 = vcmp.eq.f32.partialorder %v380, 0.0
        %v393 = vand.u32 %v380, 2147483648
        %v394 = vsel %vm392, %v393, %v391
        %v396 = vlaneseq
        %v397 = vshrl.u32 %v396, 7
        %v398 = vsub.s32 0, %v397
        %v399 = vrot.slane %v356, %v398
        %v401 = vmul.f32 %v399, %v368
        %v402 = vmul.f32 %v399, %v369
        %v403 = vadd.f32 %v387, 1e-06
        %v404 = vadd.f32 %v394, 1e-06
        %v405 = vrcp.pop %v403
        %v406 = vmul.f32 %v401, %v405
        %v407 = vrcp.pop %v404
        %v408 = vmul.f32 %v402, %v407
        %v410 = vlaneseq
        %v411 = vshrl.u32 %v410, 7
        %v412 = vsub.s32 0, %v411
        %v413 = vrot.slane %v357, %v412
        %v415 = vadd.f32 %v406, %v413
        %v416 = vadd.f32 %v408, %v413
        %v417 = vpack.c.bf16 %v416, %v415
        %v418 = vld [vmem:[#allocation4] sm:$0xf]
        %v419 = vld [vmem:[#allocation4 + $0x4] sm:$0xf]
        %v420 = vld [vmem:[#allocation4 + $0x8] sm:$0xf]
        %v421 = vld [vmem:[#allocation4 + $0xc] sm:$0xf]
        %v426 = vunpack.c.l.b16 %v418
        %v427 = vunpack.c.l.b16 %v419
        %v428 = vunpack.c.l.b16 %v420
        %v429 = vunpack.c.l.b16 %v421
        %v430 = vpack.c.b16 %v427, %v426
        %v431 = vpack.c.b16 %v429, %v428
        %v435 = vsel %vm358, %v417, 0
        %437 = vmatprep.subr.bf16.mxu0 0
        %438 = vmatpush1.bf16.msra.mxu0 0
        %439 = vmatprep.subr.bf16.mxu0 0
        %440 = vmatpush1.bf16.msra.mxu0 0
        %441 = vmatprep.subr.bf16.mxu0 0
        %442 = vmatpush1.bf16.msra.mxu0 0
        %443 = vmatprep.subr.bf16.mxu0 0
        %444 = vmatpush1.bf16.msra.mxu0 0
        %445 = vmatprep.subr.bf16.mxu0 0
        %446 = vmatpush1.bf16.msra.mxu0 0
        %447 = vmatprep.subr.bf16.mxu0 0
        %448 = vmatpush1.bf16.msra.mxu0 0
        %449 = vmatprep.subr.bf16.mxu0 0
        %450 = vmatpush1.bf16.msra.mxu0 %v431
        %451 = vmatprep.subr.bf16.mxu0 0
        %452 = vmatpush1.bf16.msra.mxu0 %v430
        %453 = vmatprep.subr.bf16.mxu0 0
        %454 = vmatpush2.bf16.msra.mxu0 0
        %455 = vmatprep.subr.bf16.mxu0 0
        %456 = vmatpush2.bf16.msra.mxu0 0
        %457 = vmatprep.subr.bf16.mxu0 0
        %458 = vmatpush2.bf16.msra.mxu0 0
        %459 = vmatprep.subr.bf16.mxu0 0
        %460 = vmatpush2.bf16.msra.mxu0 0
        %461 = vmatprep.subr.bf16.mxu0 0
        %462 = vmatpush2.bf16.msra.mxu0 0
        %463 = vmatprep.subr.bf16.mxu0 0
        %464 = vmatpush2.bf16.msra.mxu0 0
        %465 = vmatprep.subr.bf16.mxu0 0
        %466 = vmatpush2.bf16.msra.mxu0 0
        %467 = vmatprep.subr.bf16.mxu0 0
        %468 = vmatpush2.bf16.msra.mxu0 0
        %469 = vmatprep.mubr.bf16.mxu0 0
        %470 = vmatmul.mubr.bf16.gmra.mxu0 %v435
        %v471 = vpop.f32.mrf.mxu0
        %v472 = vadd.f32 0.0, %v471
        %v473 = vpop.f32.mrf.mxu0
        %v474 = vpop.f32.mrf.mxu0
        %v475 = vadd.f32 0.0, %v474
        %v476 = vpop.f32.mrf.mxu0
        %477 = vdwg.mxu0
        %v478 = vld [vmem:[#allocation6] sm:$0xf]
        %v479 = vld [vmem:[#allocation6 + $0x4] sm:$0xf]
        %v480 = vld [vmem:[#allocation6 + $0x8] sm:$0xf]
        %v481 = vld [vmem:[#allocation6 + $0xc] sm:$0xf]
        %v486 = vunpack.c.l.b16 %v478
        %v487 = vunpack.c.l.b16 %v479
        %v488 = vunpack.c.l.b16 %v480
        %v489 = vunpack.c.l.b16 %v481
        %v490 = vpack.c.b16 %v487, %v486
        %v491 = vpack.c.b16 %v489, %v488
        %494 = vmatprep.subr.bf16.mxu0 0
        %495 = vmatpush1.bf16.msra.mxu0 0
        %496 = vmatprep.subr.bf16.mxu0 0
        %497 = vmatpush1.bf16.msra.mxu0 0
        %498 = vmatprep.subr.bf16.mxu0 0
        %499 = vmatpush1.bf16.msra.mxu0 0
        %500 = vmatprep.subr.bf16.mxu0 0
        %501 = vmatpush1.bf16.msra.mxu0 0
        %502 = vmatprep.subr.bf16.mxu0 0
        %503 = vmatpush1.bf16.msra.mxu0 0
        %504 = vmatprep.subr.bf16.mxu0 0
        %505 = vmatpush1.bf16.msra.mxu0 0
        %506 = vmatprep.subr.bf16.mxu0 0
        %507 = vmatpush1.bf16.msra.mxu0 %v491
        %508 = vmatprep.subr.bf16.mxu0 0
        %509 = vmatpush1.bf16.msra.mxu0 %v490
        %510 = vmatprep.subr.bf16.mxu0 0
        %511 = vmatpush2.bf16.msra.mxu0 0
        %512 = vmatprep.subr.bf16.mxu0 0
        %513 = vmatpush2.bf16.msra.mxu0 0
        %514 = vmatprep.subr.bf16.mxu0 0
        %515 = vmatpush2.bf16.msra.mxu0 0
        %516 = vmatprep.subr.bf16.mxu0 0
        %517 = vmatpush2.bf16.msra.mxu0 0
        %518 = vmatprep.subr.bf16.mxu0 0
        %519 = vmatpush2.bf16.msra.mxu0 0
        %520 = vmatprep.subr.bf16.mxu0 0
        %521 = vmatpush2.bf16.msra.mxu0 0
        %522 = vmatprep.subr.bf16.mxu0 0
        %523 = vmatpush2.bf16.msra.mxu0 0
        %524 = vmatprep.subr.bf16.mxu0 0
        %525 = vmatpush2.bf16.msra.mxu0 0
        %526 = vmatprep.mubr.bf16.mxu0 0
        %527 = vmatmul.mubr.bf16.gmra.mxu0 %v435
        %v528 = vpop.f32.mrf.mxu0
        %v529 = vadd.f32 0.0, %v528
        %v530 = vpop.f32.mrf.mxu0
        %v531 = vpop.f32.mrf.mxu0
        %v532 = vadd.f32 0.0, %v531
        %v533 = vpop.f32.mrf.mxu0
        %534 = vdwg.mxu0
        %537 = vrot.lane.b32.xlu0 %v472, 120
        %v538 = vpop.permute.xlu0 %537
        %539 = vrot.lane.b32.xlu0 %v475, 120
        %v540 = vpop.permute.xlu0 %539
        %543 = vrot.lane.b32.xlu0 %v472, 112
        %v544 = vpop.permute.xlu0 %543
        %545 = vrot.lane.b32.xlu0 %v475, 112
        %v546 = vpop.permute.xlu0 %545
        %549 = vrot.lane.b32.xlu0 %v472, 104
        %v550 = vpop.permute.xlu0 %549
        %551 = vrot.lane.b32.xlu0 %v475, 104
        %v552 = vpop.permute.xlu0 %551
        %v555 = vcombine.low %v472, %v544
        %v556 = vcombine.high %v472, %v544
        %v558 = vunpack.c.l.s4 1983009808
        %v559 = vunpack.c.0.s8 %v558
        %v560 = vlaneseq
        %v561 = vshrl.u32 %v560, 7
        %v562 = vsub.s32 %v559, %v561
        %v563 = vrot.slane %v555, %v562
        %v565 = vunpack.c.l.s4 1983009808
        %v566 = vunpack.c.0.s8 %v565
        %v567 = vlaneseq
        %v568 = vshrl.u32 %v567, 7
        %v569 = vsub.s32 %v566, %v568
        %v570 = vrot.slane %v556, %v569
        %v571 = vcombine.low %v538, %v550
        %v572 = vcombine.high %v538, %v550
        %v574 = vunpack.c.l.s4 1983009808
        %v575 = vunpack.c.0.s8 %v574
        %v576 = vlaneseq
        %v577 = vshrl.u32 %v576, 7
        %v578 = vsub.s32 %v575, %v577
        %v579 = vrot.slane %v571, %v578
        %v581 = vunpack.c.l.s4 1983009808
        %v582 = vunpack.c.0.s8 %v581
        %v583 = vlaneseq
        %v584 = vshrl.u32 %v583, 7
        %v585 = vsub.s32 %v582, %v584
        %v586 = vrot.slane %v572, %v585
        %v587 = vcombine.low %v563, %v579
        %v588 = vcombine.high %v563, %v579
        %v590 = vunpack.c.l.s4 1934713408
        %v591 = vunpack.c.0.s8 %v590
        %v592 = vlaneseq
        %v593 = vshrl.u32 %v592, 7
        %v594 = vsub.s32 %v591, %v593
        %v595 = vrot.slane %v587, %v594
        %v597 = vunpack.c.l.s4 1934713408
        %v598 = vunpack.c.0.s8 %v597
        %v599 = vlaneseq
        %v600 = vshrl.u32 %v599, 7
        %v601 = vsub.s32 %v598, %v600
        %v602 = vrot.slane %v588, %v601
        %v603 = vcombine.low %v570, %v586
        %v604 = vcombine.high %v570, %v586
        %v606 = vunpack.c.l.s4 1934713408
        %v607 = vunpack.c.0.s8 %v606
        %v608 = vlaneseq
        %v609 = vshrl.u32 %v608, 7
        %v610 = vsub.s32 %v607, %v609
        %v611 = vrot.slane %v603, %v610
        %v613 = vunpack.c.l.s4 1934713408
        %v614 = vunpack.c.0.s8 %v613
        %v615 = vlaneseq
        %v616 = vshrl.u32 %v615, 7
        %v617 = vsub.s32 %v614, %v616
        %v618 = vrot.slane %v604, %v617
        %v619 = vcombine.high %v595, 0.0
        %v620 = vcombine.high %v602, 0.0
        %v621 = vcombine.high %v611, 0.0
        %v622 = vcombine.high %v618, 0.0
        %v623 = vcombine.low %v475, %v546
        %v624 = vcombine.high %v475, %v546
        %v626 = vunpack.c.l.s4 1983009808
        %v627 = vunpack.c.0.s8 %v626
        %v628 = vlaneseq
        %v629 = vshrl.u32 %v628, 7
        %v630 = vsub.s32 %v627, %v629
        %v631 = vrot.slane %v623, %v630
        %v633 = vunpack.c.l.s4 1983009808
        %v634 = vunpack.c.0.s8 %v633
        %v635 = vlaneseq
        %v636 = vshrl.u32 %v635, 7
        %v637 = vsub.s32 %v634, %v636
        %v638 = vrot.slane %v624, %v637
        %v639 = vcombine.low %v540, %v552
        %v640 = vcombine.high %v540, %v552
        %v642 = vunpack.c.l.s4 1983009808
        %v643 = vunpack.c.0.s8 %v642
        %v644 = vlaneseq
        %v645 = vshrl.u32 %v644, 7
        %v646 = vsub.s32 %v643, %v645
        %v647 = vrot.slane %v639, %v646
        %v649 = vunpack.c.l.s4 1983009808
        %v650 = vunpack.c.0.s8 %v649
        %v651 = vlaneseq
        %v652 = vshrl.u32 %v651, 7
        %v653 = vsub.s32 %v650, %v652
        %v654 = vrot.slane %v640, %v653
        %v655 = vcombine.low %v631, %v647
        %v656 = vcombine.high %v631, %v647
        %v658 = vunpack.c.l.s4 1934713408
        %v659 = vunpack.c.0.s8 %v658
        %v660 = vlaneseq
        %v661 = vshrl.u32 %v660, 7
        %v662 = vsub.s32 %v659, %v661
        %v663 = vrot.slane %v655, %v662
        %v665 = vunpack.c.l.s4 1934713408
        %v666 = vunpack.c.0.s8 %v665
        %v667 = vlaneseq
        %v668 = vshrl.u32 %v667, 7
        %v669 = vsub.s32 %v666, %v668
        %v670 = vrot.slane %v656, %v669
        %v671 = vcombine.low %v638, %v654
        %v672 = vcombine.high %v638, %v654
        %v674 = vunpack.c.l.s4 1934713408
        %v675 = vunpack.c.0.s8 %v674
        %v676 = vlaneseq
        %v677 = vshrl.u32 %v676, 7
        %v678 = vsub.s32 %v675, %v677
        %v679 = vrot.slane %v671, %v678
        %v681 = vunpack.c.l.s4 1934713408
        %v682 = vunpack.c.0.s8 %v681
        %v683 = vlaneseq
        %v684 = vshrl.u32 %v683, 7
        %v685 = vsub.s32 %v682, %v684
        %v686 = vrot.slane %v672, %v685
        %v687 = vcombine.high %v663, 0.0
        %v688 = vcombine.high %v670, 0.0
        %v689 = vcombine.high %v679, 0.0
        %v690 = vcombine.high %v686, 0.0
        %v691 = vcombine.low %v595, %v602
        %v693 = vunpack.c.l.s4 1983009808
        %v694 = vunpack.c.0.s8 %v693
        %v695 = vlaneseq
        %v696 = vshrl.u32 %v695, 7
        %v697 = vsub.s32 %v694, %v696
        %v698 = vrot.slane %v691, %v697
        %v699 = vcombine.low %v619, %v620
        %v701 = vunpack.c.l.s4 1983009808
        %v702 = vunpack.c.0.s8 %v701
        %v703 = vlaneseq
        %v704 = vshrl.u32 %v703, 7
        %v705 = vsub.s32 %v702, %v704
        %v706 = vrot.slane %v699, %v705
        %v707 = vcombine.low %v611, %v618
        %v709 = vunpack.c.l.s4 1983009808
        %v710 = vunpack.c.0.s8 %v709
        %v711 = vlaneseq
        %v712 = vshrl.u32 %v711, 7
        %v713 = vsub.s32 %v710, %v712
        %v714 = vrot.slane %v707, %v713
        %v715 = vcombine.low %v621, %v622
        %v717 = vunpack.c.l.s4 1983009808
        %v718 = vunpack.c.0.s8 %v717
        %v719 = vlaneseq
        %v720 = vshrl.u32 %v719, 7
        %v721 = vsub.s32 %v718, %v720
        %v722 = vrot.slane %v715, %v721
        %v723 = vcombine.low %v698, %v706
        %v724 = vcombine.high %v698, %v706
        %v726 = vunpack.c.l.s4 1934713408
        %v727 = vunpack.c.0.s8 %v726
        %v728 = vlaneseq
        %v729 = vshrl.u32 %v728, 7
        %v730 = vsub.s32 %v727, %v729
        %v731 = vrot.slane %v723, %v730
        %v733 = vunpack.c.l.s4 1934713408
        %v734 = vunpack.c.0.s8 %v733
        %v735 = vlaneseq
        %v736 = vshrl.u32 %v735, 7
        %v737 = vsub.s32 %v734, %v736
        %v738 = vrot.slane %v724, %v737
        %v739 = vcombine.low %v714, %v722
        %v740 = vcombine.high %v714, %v722
        %v742 = vunpack.c.l.s4 1934713408
        %v743 = vunpack.c.0.s8 %v742
        %v744 = vlaneseq
        %v745 = vshrl.u32 %v744, 7
        %v746 = vsub.s32 %v743, %v745
        %v747 = vrot.slane %v739, %v746
        %v749 = vunpack.c.l.s4 1934713408
        %v750 = vunpack.c.0.s8 %v749
        %v751 = vlaneseq
        %v752 = vshrl.u32 %v751, 7
        %v753 = vsub.s32 %v750, %v752
        %v754 = vrot.slane %v740, %v753
        %v755 = vcombine.low %v731, %v747
        %v756 = vcombine.high %v731, %v747
        %v757 = vcombine.low %v738, %v754
        %v758 = vcombine.high %v738, %v754
        %v759 = vcombine.low %v663, %v670
        %v761 = vunpack.c.l.s4 1983009808
        %v762 = vunpack.c.0.s8 %v761
        %v763 = vlaneseq
        %v764 = vshrl.u32 %v763, 7
        %v765 = vsub.s32 %v762, %v764
        %v766 = vrot.slane %v759, %v765
        %v767 = vcombine.low %v687, %v688
        %v769 = vunpack.c.l.s4 1983009808
        %v770 = vunpack.c.0.s8 %v769
        %v771 = vlaneseq
        %v772 = vshrl.u32 %v771, 7
        %v773 = vsub.s32 %v770, %v772
        %v774 = vrot.slane %v767, %v773
        %v775 = vcombine.low %v679, %v686
        %v777 = vunpack.c.l.s4 1983009808
        %v778 = vunpack.c.0.s8 %v777
        %v779 = vlaneseq
        %v780 = vshrl.u32 %v779, 7
        %v781 = vsub.s32 %v778, %v780
        %v782 = vrot.slane %v775, %v781
        %v783 = vcombine.low %v689, %v690
        %v785 = vunpack.c.l.s4 1983009808
        %v786 = vunpack.c.0.s8 %v785
        %v787 = vlaneseq
        %v788 = vshrl.u32 %v787, 7
        %v789 = vsub.s32 %v786, %v788
        %v790 = vrot.slane %v783, %v789
        %v791 = vcombine.low %v766, %v774
        %v792 = vcombine.high %v766, %v774
        %v794 = vunpack.c.l.s4 1934713408
        %v795 = vunpack.c.0.s8 %v794
        %v796 = vlaneseq
        %v797 = vshrl.u32 %v796, 7
        %v798 = vsub.s32 %v795, %v797
        %v799 = vrot.slane %v791, %v798
        %v801 = vunpack.c.l.s4 1934713408
        %v802 = vunpack.c.0.s8 %v801
        %v803 = vlaneseq
        %v804 = vshrl.u32 %v803, 7
        %v805 = vsub.s32 %v802, %v804
        %v806 = vrot.slane %v792, %v805
        %v807 = vcombine.low %v782, %v790
        %v808 = vcombine.high %v782, %v790
        %v810 = vunpack.c.l.s4 1934713408
        %v811 = vunpack.c.0.s8 %v810
        %v812 = vlaneseq
        %v813 = vshrl.u32 %v812, 7
        %v814 = vsub.s32 %v811, %v813
        %v815 = vrot.slane %v807, %v814
        %v817 = vunpack.c.l.s4 1934713408
        %v818 = vunpack.c.0.s8 %v817
        %v819 = vlaneseq
        %v820 = vshrl.u32 %v819, 7
        %v821 = vsub.s32 %v818, %v820
        %v822 = vrot.slane %v808, %v821
        %v823 = vcombine.low %v799, %v815
        %v824 = vcombine.high %v799, %v815
        %v825 = vcombine.low %v806, %v822
        %v826 = vcombine.high %v806, %v822
        %v827 = vpack.c.bf16 %v823, %v755
        %v828 = vpack.c.bf16 %v824, %v756
        %v829 = vpack.c.bf16 %v825, %v757
        %v830 = vpack.c.bf16 %v826, %v758
        %v835 = vunpack.c.l.b16 %v827
        %v836 = vunpack.c.h.b16 %v827
        %v837 = vunpack.c.l.b16 %v828
        %v838 = vunpack.c.h.b16 %v828
        %v839 = vunpack.c.l.b16 %v829
        %v840 = vunpack.c.h.b16 %v829
        %v841 = vunpack.c.l.b16 %v830
        %v842 = vunpack.c.h.b16 %v830
        %v843 = vpack.c.b16 %v835, %v835
        %v844 = vpack.c.b16 %v836, %v836
        %v845 = vpack.c.b16 %v837, %v837
        %v846 = vpack.c.b16 %v838, %v838
        %v847 = vpack.c.b16 %v839, %v839
        %v848 = vpack.c.b16 %v840, %v840
        %v849 = vpack.c.b16 %v841, %v841
        %v850 = vpack.c.b16 %v842, %v842
        %vm859 = vcmask 60416
        %860 = vst.msk [vmem:[%s341] sm:$0xf] %vm859, %v843
        %861 = vst.msk [vmem:[%s341 + $0x4] sm:$0xf] %vm859, %v844
        %862 = vst.msk [vmem:[%s341 + $0x8] sm:$0xf] %vm859, %v845
        %863 = vst.msk [vmem:[%s341 + $0xc] sm:$0xf] %vm859, %v846
        %864 = vst.msk [vmem:[%s341 + $0x10] sm:$0xf] %vm859, %v847
        %865 = vst.msk [vmem:[%s341 + $0x14] sm:$0xf] %vm859, %v848
        %866 = vst.msk [vmem:[%s341 + $0x18] sm:$0xf] %vm859, %v849
        %867 = vst.msk [vmem:[%s341 + $0x1c] sm:$0xf] %vm859, %v850
        %870 = vrot.lane.b32.xlu0 %v529, 120
        %v871 = vpop.permute.xlu0 %870
        %872 = vrot.lane.b32.xlu0 %v532, 120
        %v873 = vpop.permute.xlu0 %872
        %876 = vrot.lane.b32.xlu0 %v529, 112
        %v877 = vpop.permute.xlu0 %876
        %878 = vrot.lane.b32.xlu0 %v532, 112
        %v879 = vpop.permute.xlu0 %878
        %882 = vrot.lane.b32.xlu0 %v529, 104
        %v883 = vpop.permute.xlu0 %882
        %884 = vrot.lane.b32.xlu0 %v532, 104
        %v885 = vpop.permute.xlu0 %884
        %v888 = vcombine.low %v529, %v877
        %v889 = vcombine.high %v529, %v877
        %v891 = vunpack.c.l.s4 1983009808
        %v892 = vunpack.c.0.s8 %v891
        %v893 = vlaneseq
        %v894 = vshrl.u32 %v893, 7
        %v895 = vsub.s32 %v892, %v894
        %v896 = vrot.slane %v888, %v895
        %v898 = vunpack.c.l.s4 1983009808
        %v899 = vunpack.c.0.s8 %v898
        %v900 = vlaneseq
        %v901 = vshrl.u32 %v900, 7
        %v902 = vsub.s32 %v899, %v901
        %v903 = vrot.slane %v889, %v902
        %v904 = vcombine.low %v871, %v883
        %v905 = vcombine.high %v871, %v883
        %v907 = vunpack.c.l.s4 1983009808
        %v908 = vunpack.c.0.s8 %v907
        %v909 = vlaneseq
        %v910 = vshrl.u32 %v909, 7
        %v911 = vsub.s32 %v908, %v910
        %v912 = vrot.slane %v904, %v911
        %v914 = vunpack.c.l.s4 1983009808
        %v915 = vunpack.c.0.s8 %v914
        %v916 = vlaneseq
        %v917 = vshrl.u32 %v916, 7
        %v918 = vsub.s32 %v915, %v917
        %v919 = vrot.slane %v905, %v918
        %v920 = vcombine.low %v896, %v912
        %v921 = vcombine.high %v896, %v912
        %v923 = vunpack.c.l.s4 1934713408
        %v924 = vunpack.c.0.s8 %v923
        %v925 = vlaneseq
        %v926 = vshrl.u32 %v925, 7
        %v927 = vsub.s32 %v924, %v926
        %v928 = vrot.slane %v920, %v927
        %v930 = vunpack.c.l.s4 1934713408
        %v931 = vunpack.c.0.s8 %v930
        %v932 = vlaneseq
        %v933 = vshrl.u32 %v932, 7
        %v934 = vsub.s32 %v931, %v933
        %v935 = vrot.slane %v921, %v934
        %v936 = vcombine.low %v903, %v919
        %v937 = vcombine.high %v903, %v919
        %v939 = vunpack.c.l.s4 1934713408
        %v940 = vunpack.c.0.s8 %v939
        %v941 = vlaneseq
        %v942 = vshrl.u32 %v941, 7
        %v943 = vsub.s32 %v940, %v942
        %v944 = vrot.slane %v936, %v943
        %v946 = vunpack.c.l.s4 1934713408
        %v947 = vunpack.c.0.s8 %v946
        %v948 = vlaneseq
        %v949 = vshrl.u32 %v948, 7
        %v950 = vsub.s32 %v947, %v949
        %v951 = vrot.slane %v937, %v950
        %v952 = vcombine.high %v928, 0.0
        %v953 = vcombine.high %v935, 0.0
        %v954 = vcombine.high %v944, 0.0
        %v955 = vcombine.high %v951, 0.0
        %v956 = vcombine.low %v532, %v879
        %v957 = vcombine.high %v532, %v879
        %v959 = vunpack.c.l.s4 1983009808
        %v960 = vunpack.c.0.s8 %v959
        %v961 = vlaneseq
        %v962 = vshrl.u32 %v961, 7
        %v963 = vsub.s32 %v960, %v962
        %v964 = vrot.slane %v956, %v963
        %v966 = vunpack.c.l.s4 1983009808
        %v967 = vunpack.c.0.s8 %v966
        %v968 = vlaneseq
        %v969 = vshrl.u32 %v968, 7
        %v970 = vsub.s32 %v967, %v969
        %v971 = vrot.slane %v957, %v970
        %v972 = vcombine.low %v873, %v885
        %v973 = vcombine.high %v873, %v885
        %v975 = vunpack.c.l.s4 1983009808
        %v976 = vunpack.c.0.s8 %v975
        %v977 = vlaneseq
        %v978 = vshrl.u32 %v977, 7
        %v979 = vsub.s32 %v976, %v978
        %v980 = vrot.slane %v972, %v979
        %v982 = vunpack.c.l.s4 1983009808
        %v983 = vunpack.c.0.s8 %v982
        %v984 = vlaneseq
        %v985 = vshrl.u32 %v984, 7
        %v986 = vsub.s32 %v983, %v985
        %v987 = vrot.slane %v973, %v986
        %v988 = vcombine.low %v964, %v980
        %v989 = vcombine.high %v964, %v980
        %v991 = vunpack.c.l.s4 1934713408
        %v992 = vunpack.c.0.s8 %v991
        %v993 = vlaneseq
        %v994 = vshrl.u32 %v993, 7
        %v995 = vsub.s32 %v992, %v994
        %v996 = vrot.slane %v988, %v995
        %v998 = vunpack.c.l.s4 1934713408
        %v999 = vunpack.c.0.s8 %v998
        %v1000 = vlaneseq
        %v1001 = vshrl.u32 %v1000, 7
        %v1002 = vsub.s32 %v999, %v1001
        %v1003 = vrot.slane %v989, %v1002
        %v1004 = vcombine.low %v971, %v987
        %v1005 = vcombine.high %v971, %v987
        %v1007 = vunpack.c.l.s4 1934713408
        %v1008 = vunpack.c.0.s8 %v1007
        %v1009 = vlaneseq
        %v1010 = vshrl.u32 %v1009, 7
        %v1011 = vsub.s32 %v1008, %v1010
        %v1012 = vrot.slane %v1004, %v1011
        %v1014 = vunpack.c.l.s4 1934713408
        %v1015 = vunpack.c.0.s8 %v1014
        %v1016 = vlaneseq
        %v1017 = vshrl.u32 %v1016, 7
        %v1018 = vsub.s32 %v1015, %v1017
        %v1019 = vrot.slane %v1005, %v1018
        %v1020 = vcombine.high %v996, 0.0
        %v1021 = vcombine.high %v1003, 0.0
        %v1022 = vcombine.high %v1012, 0.0
        %v1023 = vcombine.high %v1019, 0.0
        %v1024 = vcombine.low %v928, %v935
        %v1026 = vunpack.c.l.s4 1983009808
        %v1027 = vunpack.c.0.s8 %v1026
        %v1028 = vlaneseq
        %v1029 = vshrl.u32 %v1028, 7
        %v1030 = vsub.s32 %v1027, %v1029
        %v1031 = vrot.slane %v1024, %v1030
        %v1032 = vcombine.low %v952, %v953
        %v1034 = vunpack.c.l.s4 1983009808
        %v1035 = vunpack.c.0.s8 %v1034
        %v1036 = vlaneseq
        %v1037 = vshrl.u32 %v1036, 7
        %v1038 = vsub.s32 %v1035, %v1037
        %v1039 = vrot.slane %v1032, %v1038
        %v1040 = vcombine.low %v944, %v951
        %v1042 = vunpack.c.l.s4 1983009808
        %v1043 = vunpack.c.0.s8 %v1042
        %v1044 = vlaneseq
        %v1045 = vshrl.u32 %v1044, 7
        %v1046 = vsub.s32 %v1043, %v1045
        %v1047 = vrot.slane %v1040, %v1046
        %v1048 = vcombine.low %v954, %v955
        %v1050 = vunpack.c.l.s4 1983009808
        %v1051 = vunpack.c.0.s8 %v1050
        %v1052 = vlaneseq
        %v1053 = vshrl.u32 %v1052, 7
        %v1054 = vsub.s32 %v1051, %v1053
        %v1055 = vrot.slane %v1048, %v1054
        %v1056 = vcombine.low %v1031, %v1039
        %v1057 = vcombine.high %v1031, %v1039
        %v1059 = vunpack.c.l.s4 1934713408
        %v1060 = vunpack.c.0.s8 %v1059
        %v1061 = vlaneseq
        %v1062 = vshrl.u32 %v1061, 7
        %v1063 = vsub.s32 %v1060, %v1062
        %v1064 = vrot.slane %v1056, %v1063
        %v1066 = vunpack.c.l.s4 1934713408
        %v1067 = vunpack.c.0.s8 %v1066
        %v1068 = vlaneseq
        %v1069 = vshrl.u32 %v1068, 7
        %v1070 = vsub.s32 %v1067, %v1069
        %v1071 = vrot.slane %v1057, %v1070
        %v1072 = vcombine.low %v1047, %v1055
        %v1073 = vcombine.high %v1047, %v1055
        %v1075 = vunpack.c.l.s4 1934713408
        %v1076 = vunpack.c.0.s8 %v1075
        %v1077 = vlaneseq
        %v1078 = vshrl.u32 %v1077, 7
        %v1079 = vsub.s32 %v1076, %v1078
        %v1080 = vrot.slane %v1072, %v1079
        %v1082 = vunpack.c.l.s4 1934713408
        %v1083 = vunpack.c.0.s8 %v1082
        %v1084 = vlaneseq
        %v1085 = vshrl.u32 %v1084, 7
        %v1086 = vsub.s32 %v1083, %v1085
        %v1087 = vrot.slane %v1073, %v1086
        %v1088 = vcombine.low %v1064, %v1080
        %v1089 = vcombine.high %v1064, %v1080
        %v1090 = vcombine.low %v1071, %v1087
        %v1091 = vcombine.high %v1071, %v1087
        %v1092 = vcombine.low %v996, %v1003
        %v1094 = vunpack.c.l.s4 1983009808
        %v1095 = vunpack.c.0.s8 %v1094
        %v1096 = vlaneseq
        %v1097 = vshrl.u32 %v1096, 7
        %v1098 = vsub.s32 %v1095, %v1097
        %v1099 = vrot.slane %v1092, %v1098
        %v1100 = vcombine.low %v1020, %v1021
        %v1102 = vunpack.c.l.s4 1983009808
        %v1103 = vunpack.c.0.s8 %v1102
        %v1104 = vlaneseq
        %v1105 = vshrl.u32 %v1104, 7
        %v1106 = vsub.s32 %v1103, %v1105
        %v1107 = vrot.slane %v1100, %v1106
        %v1108 = vcombine.low %v1012, %v1019
        %v1110 = vunpack.c.l.s4 1983009808
        %v1111 = vunpack.c.0.s8 %v1110
        %v1112 = vlaneseq
        %v1113 = vshrl.u32 %v1112, 7
        %v1114 = vsub.s32 %v1111, %v1113
        %v1115 = vrot.slane %v1108, %v1114
        %v1116 = vcombine.low %v1022, %v1023
        %v1118 = vunpack.c.l.s4 1983009808
        %v1119 = vunpack.c.0.s8 %v1118
        %v1120 = vlaneseq
        %v1121 = vshrl.u32 %v1120, 7
        %v1122 = vsub.s32 %v1119, %v1121
        %v1123 = vrot.slane %v1116, %v1122
        %v1124 = vcombine.low %v1099, %v1107
        %v1125 = vcombine.high %v1099, %v1107
        %v1127 = vunpack.c.l.s4 1934713408
        %v1128 = vunpack.c.0.s8 %v1127
        %v1129 = vlaneseq
        %v1130 = vshrl.u32 %v1129, 7
        %v1131 = vsub.s32 %v1128, %v1130
        %v1132 = vrot.slane %v1124, %v1131
        %v1134 = vunpack.c.l.s4 1934713408
        %v1135 = vunpack.c.0.s8 %v1134
        %v1136 = vlaneseq
        %v1137 = vshrl.u32 %v1136, 7
        %v1138 = vsub.s32 %v1135, %v1137
        %v1139 = vrot.slane %v1125, %v1138
        %v1140 = vcombine.low %v1115, %v1123
        %v1141 = vcombine.high %v1115, %v1123
        %v1143 = vunpack.c.l.s4 1934713408
        %v1144 = vunpack.c.0.s8 %v1143
        %v1145 = vlaneseq
        %v1146 = vshrl.u32 %v1145, 7
        %v1147 = vsub.s32 %v1144, %v1146
        %v1148 = vrot.slane %v1140, %v1147
        %v1150 = vunpack.c.l.s4 1934713408
        %v1151 = vunpack.c.0.s8 %v1150
        %v1152 = vlaneseq
        %v1153 = vshrl.u32 %v1152, 7
        %v1154 = vsub.s32 %v1151, %v1153
        %v1155 = vrot.slane %v1141, %v1154
        %v1156 = vcombine.low %v1132, %v1148
        %v1157 = vcombine.high %v1132, %v1148
        %v1158 = vcombine.low %v1139, %v1155
        %v1159 = vcombine.high %v1139, %v1155
        %v1160 = vpack.c.bf16 %v1156, %v1088
        %v1161 = vpack.c.bf16 %v1157, %v1089
        %v1162 = vpack.c.bf16 %v1158, %v1090
        %v1163 = vpack.c.bf16 %v1159, %v1091
        %v1168 = vunpack.c.l.b16 %v1160
        %v1169 = vunpack.c.h.b16 %v1160
        %v1170 = vunpack.c.l.b16 %v1161
        %v1171 = vunpack.c.h.b16 %v1161
        %v1172 = vunpack.c.l.b16 %v1162
        %v1173 = vunpack.c.h.b16 %v1162
        %v1174 = vunpack.c.l.b16 %v1163
        %v1175 = vunpack.c.h.b16 %v1163
        %v1176 = vpack.c.b16 %v1168, %v1168
        %v1177 = vpack.c.b16 %v1169, %v1169
        %v1178 = vpack.c.b16 %v1170, %v1170
        %v1179 = vpack.c.b16 %v1171, %v1171
        %v1180 = vpack.c.b16 %v1172, %v1172
        %v1181 = vpack.c.b16 %v1173, %v1173
        %v1182 = vpack.c.b16 %v1174, %v1174
        %v1183 = vpack.c.b16 %v1175, %v1175
        %1192 = vst.msk [vmem:[%s351] sm:$0xf] %vm859, %v1176
        %1193 = vst.msk [vmem:[%s351 + $0x4] sm:$0xf] %vm859, %v1177
        %1194 = vst.msk [vmem:[%s351 + $0x8] sm:$0xf] %vm859, %v1178
        %1195 = vst.msk [vmem:[%s351 + $0xc] sm:$0xf] %vm859, %v1179
        %1196 = vst.msk [vmem:[%s351 + $0x10] sm:$0xf] %vm859, %v1180
        %1197 = vst.msk [vmem:[%s351 + $0x14] sm:$0xf] %vm859, %v1181
        %1198 = vst.msk [vmem:[%s351 + $0x18] sm:$0xf] %vm859, %v1182
        %1199 = vst.msk [vmem:[%s351 + $0x1c] sm:$0xf] %vm859, %v1183
        %s1200 = smul.u32 2, %s27
        %p1201 = scmp.lt.s32.totalorder %s26, 1
        %s1202 = scalar_select %p1201, %s26, 1
        %p1203 = scmp.lt.s32.totalorder %s1200, 1
        %s1204 = scalar_select %p1203, %s1200, 1
        %s1205 = smul.addr %s1202, 8
        %s1206 = sadd.s32 %s1204, %s1205
        %s1207 = smul.addr %s1206, 4
        %s1208 = scalar_lea.vmem %s5, %s1207
        %s1209 = smul.u32 2, %s27
        %p1210 = scmp.lt.s32.totalorder %s26, 1
        %s1211 = scalar_select %p1210, %s26, 1
        %p1212 = scmp.lt.s32.totalorder %s1209, 1
        %s1213 = scalar_select %p1212, %s1209, 1
        %s1214 = smul.addr %s1211, 8
        %s1215 = sadd.s32 %s1213, %s1214
        %s1216 = smul.addr %s1215, 4
        %s1217 = scalar_lea.vmem %s6, %s1216
        // Predicated region
        $region53: #{tpu_custom_call.1} parent=39 // pred_check
          %p1218 = pneg %p166
        $region54: #{tpu_custom_call.1} parent=39 // pred_check_branch
          %1220 = sbr.rel (%p1218) target = $region56
        $region55: #{tpu_custom_call.1} parent=39 // pred_region
          %s1221 = smul.u32 2, %s27
        $region56: #{tpu_custom_call.1} parent=39 // pred_fallthru
          _
        // Predicated region
        $region57: #{tpu_custom_call.1} parent=39 // pred_check
          %p1222 = pneg %p194
        $region58: #{tpu_custom_call.1} parent=39 // pred_check_branch
          %1224 = sbr.rel (%p1222) target = $region60
        $region59: #{tpu_custom_call.1} parent=39 // pred_region
          %s1225 = smul.u32 2, %s27
        $region60: #{tpu_custom_call.1} parent=39 // pred_fallthru
          _
      $region40: #{tpu_custom_call.1} parent=5 // pred_fallthru
        _
      %p1226 = scmp.le.s32.totalorder 2, %s17
      // Predicated region
      $region61: #{tpu_custom_call.1} parent=5 // pred_check
        %p1227 = pneg %p1226
      $region62: #{tpu_custom_call.1} parent=5 // pred_check_branch
        %1229 = sbr.rel (%p1227) target = $region64
      $region63: #{tpu_custom_call.1} parent=5 // pred_region
        %s1230 = ssub.s32 %s17, 2
        // Predicated region
        $region65: #{tpu_custom_call.1} parent=63 // pred_check
          %p1231 = pneg %p172
        $region66: #{tpu_custom_call.1} parent=63 // pred_check_branch
          %1233 = sbr.rel (%p1231) target = $region68
        $region67: #{tpu_custom_call.1} parent=63 // pred_region
          %s1234 = smul.u32 2, %s29
          %p1235 = scmp.lt.s32.totalorder %s28, 1
          %s1236 = scalar_select %p1235, %s28, 1
          %p1237 = scmp.lt.s32.totalorder %s1234, 1
          %s1238 = scalar_select %p1237, %s1234, 1
          %s1239 = smul.addr %s1236, 8
          %s1240 = sadd.s32 %s1238, %s1239
          %s1241 = smul.addr %s1240, 4
          %s1242 = scalar_lea.vmem %s5, %s1241
        $region68: #{tpu_custom_call.1} parent=63 // pred_fallthru
          _
        // Predicated region
        $region69: #{tpu_custom_call.1} parent=63 // pred_check
          %p1243 = pneg %p200
        $region70: #{tpu_custom_call.1} parent=63 // pred_check_branch
          %1245 = sbr.rel (%p1243) target = $region72
        $region71: #{tpu_custom_call.1} parent=63 // pred_region
          %s1246 = smul.u32 2, %s29
          %p1247 = scmp.lt.s32.totalorder %s28, 1
          %s1248 = scalar_select %p1247, %s28, 1
          %p1249 = scmp.lt.s32.totalorder %s1246, 1
          %s1250 = scalar_select %p1249, %s1246, 1
          %s1251 = smul.addr %s1248, 8
          %s1252 = sadd.s32 %s1250, %s1251
          %s1253 = smul.addr %s1252, 4
          %s1254 = scalar_lea.vmem %s6, %s1253
        $region72: #{tpu_custom_call.1} parent=63 // pred_fallthru
          _
      $region64: #{tpu_custom_call.1} parent=5 // pred_fallthru
        _
    $region6: #{tpu_custom_call.1} parent=1 // loop_footer
      %s21 = sadd.s32 1, %s17
    $region7: #{tpu_custom_call.1} parent=1 // loop_footer_branch
      %16 = sbr.rel target = $region3
    $region8: #{tpu_custom_call.1} parent=1 // loop_exit
      _
    %1255 = vsyncpa [#allocation3], 1
    %s1256 = scalar_lea.sflag [#allocation3], 1
    %1257 = vsyncpa %s1256, 1
    %1258 = vsyncpa [#allocation5], 1

</llo_original>
